<compile_context>
chip_gen: v7x
topology: tpu7x:2x2x1
jax: 0.10.0
libtpu: 0.0.40
codegen_flags: <defaults>
</compile_context>

<pallas_src>
import jax
import jax.numpy as jnp
from jax.experimental import pallas as pl
from jax.experimental.pallas import tpu as pltpu


def _round_up(n, m):
    return ((n + m - 1) // m) * m


def _num_tensorcores():
    """Best-effort detection of TensorCores per chip (v7x has 2)."""
    try:
        kind = jax.devices()[0].device_kind.lower()
        return 2 if "v7" in kind else 1
    except Exception:  # pragma: no cover - defensive
        return 1


# --------------------------------------------------------------------------
# kernel: fused 4-layer MLP, BN already folded into (w, b)
# --------------------------------------------------------------------------
def encoder_kernel(x_ref,
                   w1_ref, b1_ref,
                   w2_ref, b2_ref,
                   w3_ref, b3_ref,
                   w4_ref, b4_ref,
                   o_ref):
    cd = w1_ref.dtype  # MXU operand dtype (bf16); accumulation is f32

    # block 1: Linear(dim -> H) [+ folded BN] + ReLU (+ Dropout == identity)
    h = jnp.dot(x_ref[...].astype(cd), w1_ref[...],
                preferred_element_type=jnp.float32)
    h = jnp.maximum(h + b1_ref[...], 0.0)
    # TODO(synk): training-mode Dropout (stochastic masking) not implemented;
    # eval-mode Dropout is the identity.

    # block 2: Linear(H -> H) [+ folded BN] + ReLU
    h = jnp.dot(h.astype(cd), w2_ref[...], preferred_element_type=jnp.float32)
    h = jnp.maximum(h + b2_ref[...], 0.0)

    # block 3: Linear(H -> H) [+ folded BN] + ReLU
    h = jnp.dot(h.astype(cd), w3_ref[...], preferred_element_type=jnp.float32)
    h = jnp.maximum(h + b3_ref[...], 0.0)

    # block 4: Linear(H -> out_dim_padded)
    out = jnp.dot(h.astype(cd), w4_ref[...], preferred_element_type=jnp.float32)
    o_ref[...] = (out + b4_ref[...]).astype(o_ref.dtype)


# --------------------------------------------------------------------------
# one-time parameter preparation (fold BN, pad to lane width, cast to bf16)
# --------------------------------------------------------------------------
def prepare_params(folded, compute_dtype=jnp.bfloat16):
    """Pads D/H/O to multiples of 128 and casts weights to the MXU dtype.

    Run ONCE (not per forward call).  Zero-padding is exact:
    ReLU(0 + 0) = 0 and zero rows of the next weight contribute nothing.
    """
    D, H = folded["w1"].shape
    O = folded["w4"].shape[1]
    D_pad = _round_up(D, 128)
    H_pad = _round_up(H, 128)
    O_pad = _round_up(O, 128)

    def pad2(a, rows, cols):
        return jnp.pad(a, ((0, rows - a.shape[0]), (0, cols - a.shape[1])))

    prep = {
        "w1": pad2(folded["w1"], D_pad, H_pad).astype(compute_dtype),
        "b1": pad2(folded["b1"], 1, H_pad).astype(jnp.float32),
        "w2": pad2(folded["w2"], H_pad, H_pad).astype(compute_dtype),
        "b2": pad2(folded["b2"], 1, H_pad).astype(jnp.float32),
        "w3": pad2(folded["w3"], H_pad, H_pad).astype(compute_dtype),
        "b3": pad2(folded["b3"], 1, H_pad).astype(jnp.float32),
        "w4": pad2(folded["w4"], H_pad, O_pad).astype(compute_dtype),
        "b4": pad2(folded["b4"], 1, O_pad).astype(jnp.float32),
    }
    dims = {"D": D, "H": H, "O": O, "D_pad": D_pad, "H_pad": H_pad, "O_pad": O_pad}
    return prep, dims


# --------------------------------------------------------------------------
# forward wrapper: a single pallas_call (plus cheap input/row padding)
# --------------------------------------------------------------------------
def encoder_forward(x, prep, dims, *, max_block_b=1024):
    """x: [B, dim] f32 -> [B, out_dim] f32 (eval-mode Encoder forward)."""
    B, D = x.shape
    assert D == dims["D"]
    D_pad, H_pad, O_pad = dims["D_pad"], dims["H_pad"], dims["O_pad"]
    O = dims["O"]

    # lane-pad the input feature dim (weights were padded once in prep)
    if D_pad != D:
        x = jnp.pad(x, ((0, 0), (0, D_pad - D)))

    # batch tile: whole batch on 1-TC chips; >= 2 grid steps on 2-TC chips
    n_cores = _num_tensorcores()
    n_splits = n_cores if (n_cores > 1 and B >= 32 * n_cores) else 1
    block_b = min(_round_up(pl.cdiv(B, n_splits), 16), max_block_b)
    B_pad = _round_up(B, block_b)
    if B_pad != B:
        x = jnp.pad(x, ((0, B_pad - B), (0, 0)))
    grid = (B_pad // block_b,)

    def const_spec(shape):
        # same parameter block every grid step -> single-buffered
        return pl.BlockSpec(shape, lambda i: (0,) * len(shape),
                            pipeline_mode=pl.Buffered(1))

    in_specs = [
        pl.BlockSpec((block_b, D_pad), lambda i: (i, 0)),        # x
        const_spec((D_pad, H_pad)), const_spec((1, H_pad)),      # layer 1 (folded)
        const_spec((H_pad, H_pad)), const_spec((1, H_pad)),      # layer 2 (folded)
        const_spec((H_pad, H_pad)), const_spec((1, H_pad)),      # layer 3 (folded)
        const_spec((H_pad, O_pad)), const_spec((1, O_pad)),      # layer 4
    ]
    out_spec = pl.BlockSpec((block_b, O_pad), lambda i: (i, 0))

    # ---- explicit VMEM budget: weights single-buffered, x/out double-buffered
    bytes_params = sum(prep[k].size * prep[k].dtype.itemsize for k in prep)
    bytes_io = 2 * block_b * D_pad * 4 + 2 * block_b * O_pad * 4
    bytes_act = 3 * block_b * H_pad * 4
    budget = bytes_params + bytes_io + bytes_act
    vmem_limit = int(min(max(budget * 1.25, 8 * 1024 * 1024), 64 * 1024 * 1024))
    # TODO(synk): for very large hidden dims on v7x (64 MiB VMEM) add a
    # contraction-tiled fallback path instead of keeping all weights resident.

    flops = 2 * B_pad * (D_pad * H_pad + 2 * H_pad * H_pad + H_pad * O_pad)
    bytes_accessed = int(x.size * x.dtype.itemsize + bytes_params
                         + B_pad * O_pad * 4)

    fn = pl.pallas_call(
        encoder_kernel,
        out_shape=jax.ShapeDtypeStruct((B_pad, O_pad), jnp.float32),
        grid_spec=pltpu.PrefetchScalarGridSpec(
            num_scalar_prefetch=0,
            grid=grid,
            in_specs=in_specs,
            out_specs=out_spec,
        ),
        compiler_params=pltpu.CompilerParams(
            dimension_semantics=("parallel",),
            vmem_limit_bytes=vmem_limit),
        cost_estimate=pl.CostEstimate(
            flops=flops, transcendentals=0, bytes_accessed=bytes_accessed),
    )
    out = fn(x, prep["w1"], prep["b1"], prep["w2"], prep["b2"],
             prep["w3"], prep["b3"], prep["w4"], prep["b4"])
    return out[:B, :O]


# --------------------------------------------------------------------------
# parameters: raw Linear + eval-mode BatchNorm (s, t), then fold BN -> Linear
# --------------------------------------------------------------------------
def make_params(key, dim, hidden, out_dim, eps=1e-5):
    """Linear weights stored as [in, out] (PyTorch forward does x @ W.T, so this
    layout gives identical math).  BatchNorm1d (eval) reduced to
    s = gamma / sqrt(var + eps), t = beta - mean * s."""
    keys = jax.random.split(key, 20)
    p = {}

    def lin(kw, kb, fan_in, fan_out):
        bound = 1.0 / jnp.sqrt(fan_in)
        w = jax.random.uniform(kw, (fan_in, fan_out), jnp.float32, -bound, bound)
        b = jax.random.uniform(kb, (1, fan_out), jnp.float32, -bound, bound)
        return w, b

    def bn(kg, kb, km, kv, n):
        gamma = 1.0 + 0.1 * jax.random.normal(kg, (1, n), jnp.float32)
        beta = 0.1 * jax.random.normal(kb, (1, n), jnp.float32)
        mean = 0.1 * jax.random.normal(km, (1, n), jnp.float32)
        var = jnp.abs(1.0 + 0.1 * jax.random.normal(kv, (1, n), jnp.float32))
        s = gamma * jax.lax.rsqrt(var + eps)
        t = beta - mean * s
        return s, t

    p["w1"], p["b1"] = lin(keys[0], keys[1], dim, hidden)
    p["s1"], p["t1"] = bn(keys[2], keys[3], keys[4], keys[5], hidden)
    p["w2"], p["b2"] = lin(keys[6], keys[7], hidden, hidden)
    p["s2"], p["t2"] = bn(keys[8], keys[9], keys[10], keys[11], hidden)
    p["w3"], p["b3"] = lin(keys[12], keys[13], hidden, hidden)
    p["s3"], p["t3"] = bn(keys[14], keys[15], keys[16], keys[17], hidden)
    p["w4"], p["b4"] = lin(keys[18], keys[19], hidden, out_dim)
    return p


def fold_bn_into_linear(p):
    """(x@w + b)*s + t  ==  x@(w*s) + (b*s + t)  — exact re-association."""
    f = {}
    for i in (1, 2, 3):
        w, b = p[f"w{i}"], p[f"b{i}"]
        s, t = p[f"s{i}"], p[f"t{i}"]
        f[f"w{i}"] = w * s
        f[f"b{i}"] = b * s + t
    f["w4"], f["b4"] = p["w4"], p["b4"]
    return f


# --------------------------------------------------------------------------
# references
# --------------------------------------------------------------------------
def encoder_reference_matched(x, folded, compute_dtype=jnp.bfloat16):
    """Pure-JAX reference mirroring the kernel's bf16-operand / f32-accum math."""
    cd = compute_dtype

    def lin(h, w, b):
        return jnp.dot(h.astype(cd), w.astype(cd),
                       preferred_element_type=jnp.float32) + b

    h = jnp.maximum(lin(x, folded["w1"], folded["b1"]), 0.0)
    h = jnp.maximum(lin(h, folded["w2"], folded["b2"]), 0.0)
    h = jnp.maximum(lin(h, folded["w3"], folded["b3"]), 0.0)
    return lin(h, folded["w4"], folded["b4"])


def encoder_reference_f32(x, p):
    """Full-f32, un-folded reference of the original module (eval mode)."""
    h = jnp.maximum((x @ p["w1"] + p["b1"]) * p["s1"] + p["t1"], 0.0)
    h = jnp.maximum((h @ p["w2"] + p["b2"]) * p["s2"] + p["t2"], 0.0)
    h = jnp.maximum((h @ p["w3"] + p["b3"]) * p["s3"] + p["t3"], 0.0)
    return h @ p["w4"] + p["b4"]


if __name__ == "__main__":
    # Small cfg: dim=32, encoder_hidden_dim=64, encoder_out_dim=16, batch=64
    B, DIM, HID, OUT = 64, 32, 64, 16

    key = jax.random.PRNGKey(0)
    kx, kp = jax.random.split(key)
    x = jax.random.normal(kx, (B, DIM), jnp.float32)
    params = make_params(kp, DIM, HID, OUT)

    # one-time prep: fold BN, pad to lane width, cast to bf16
    folded = fold_bn_into_linear(params)
    prep, dims = prepare_params(folded)
    prep = jax.tree_util.tree_map(jax.block_until_ready, prep)

    out = encoder_forward(x, prep, dims)
    out = jax.block_until_ready(out)
    assert out.shape == (B, OUT)

    # exact-math check against a reference using identical bf16/f32 arithmetic
    ref_bf16 = encoder_reference_matched(x, folded)
    assert jnp.allclose(out, ref_bf16, atol=1e-3, rtol=1e-3), "mismatch (matched ref)"

    # sanity check against the full-f32 un-folded original semantics
    ref_f32 = encoder_reference_f32(x, params)
    assert float(jnp.max(jnp.abs(out - ref_f32))) < 1e-1, "mismatch (f32 ref)"

    print("KERNEL_OK")
</pallas_src>

<mosaic_0001>
module attributes {stable_mosaic.version = 11 : i64} {
  func.func @encoder_kernel(%arg0: i32, %arg1: memref<64x128xf32, #tpu.memory_space<vmem>>, %arg2: memref<128x128xbf16, #tpu.memory_space<vmem>>, %arg3: memref<1x128xf32, #tpu.memory_space<vmem>>, %arg4: memref<128x128xbf16, #tpu.memory_space<vmem>>, %arg5: memref<1x128xf32, #tpu.memory_space<vmem>>, %arg6: memref<128x128xbf16, #tpu.memory_space<vmem>>, %arg7: memref<1x128xf32, #tpu.memory_space<vmem>>, %arg8: memref<128x128xbf16, #tpu.memory_space<vmem>>, %arg9: memref<1x128xf32, #tpu.memory_space<vmem>>, %arg10: memref<64x128xf32, #tpu.memory_space<vmem>>) attributes {dimension_semantics = [#tpu.dimension_semantics<parallel>], iteration_bounds = array<i64: 1>, scalar_prefetch = 0 : i64, scratch_operands = 0 : i64, tpu.core_type = #tpu.core_type<tc>, window_params = [{transform_indices = @transform_0, window_bounds = array<i64: 64, 128>}, {pipeline_mode = #tpu.pipeline_mode<synchronous>, transform_indices = @transform_1, window_bounds = array<i64: 128, 128>}, {pipeline_mode = #tpu.pipeline_mode<synchronous>, transform_indices = @transform_2, window_bounds = array<i64: 1, 128>}, {pipeline_mode = #tpu.pipeline_mode<synchronous>, transform_indices = @transform_3, window_bounds = array<i64: 128, 128>}, {pipeline_mode = #tpu.pipeline_mode<synchronous>, transform_indices = @transform_4, window_bounds = array<i64: 1, 128>}, {pipeline_mode = #tpu.pipeline_mode<synchronous>, transform_indices = @transform_5, window_bounds = array<i64: 128, 128>}, {pipeline_mode = #tpu.pipeline_mode<synchronous>, transform_indices = @transform_6, window_bounds = array<i64: 1, 128>}, {pipeline_mode = #tpu.pipeline_mode<synchronous>, transform_indices = @transform_7, window_bounds = array<i64: 128, 128>}, {pipeline_mode = #tpu.pipeline_mode<synchronous>, transform_indices = @transform_8, window_bounds = array<i64: 1, 128>}, {transform_indices = @transform_9, window_bounds = array<i64: 64, 128>}]} {
    %c0 = arith.constant 0 : index
    %c0_0 = arith.constant 0 : index
    %0 = vector.load %arg1[%c0, %c0_0] : memref<64x128xf32, #tpu.memory_space<vmem>>, vector<64x128xf32>
    %1 = arith.truncf %0 : vector<64x128xf32> to vector<64x128xbf16>
    %c0_1 = arith.constant 0 : index
    %c0_2 = arith.constant 0 : index
    %2 = vector.load %arg2[%c0_1, %c0_2] : memref<128x128xbf16, #tpu.memory_space<vmem>>, vector<128x128xbf16>
    %cst = arith.constant dense<0.000000e+00> : vector<64x128xf32>
    %3 = tpu.matmul %1, %2, %cst {dimension_numbers = #tpu.dot_dimension_numbers<[1], [0], [0], [1], [0, 0, 1, 1], [], []>} : vector<64x128xbf16>, vector<128x128xbf16>, vector<64x128xf32> -> vector<64x128xf32>
    %c0_3 = arith.constant 0 : index
    %c0_4 = arith.constant 0 : index
    %4 = vector.load %arg3[%c0_3, %c0_4] : memref<1x128xf32, #tpu.memory_space<vmem>>, vector<1x128xf32>
    %5 = vector.broadcast %4 : vector<1x128xf32> to vector<64x128xf32>
    %6 = arith.addf %3, %5 : vector<64x128xf32>
    %cst_5 = arith.constant 0.000000e+00 : f32
    %7 = vector.broadcast %cst_5 : f32 to vector<64x128xf32>
    %8 = arith.maximumf %6, %7 : vector<64x128xf32>
    %9 = arith.truncf %8 : vector<64x128xf32> to vector<64x128xbf16>
    %c0_6 = arith.constant 0 : index
    %c0_7 = arith.constant 0 : index
    %10 = vector.load %arg4[%c0_6, %c0_7] : memref<128x128xbf16, #tpu.memory_space<vmem>>, vector<128x128xbf16>
    %cst_8 = arith.constant dense<0.000000e+00> : vector<64x128xf32>
    %11 = tpu.matmul %9, %10, %cst_8 {dimension_numbers = #tpu.dot_dimension_numbers<[1], [0], [0], [1], [0, 0, 1, 1], [], []>} : vector<64x128xbf16>, vector<128x128xbf16>, vector<64x128xf32> -> vector<64x128xf32>
    %c0_9 = arith.constant 0 : index
    %c0_10 = arith.constant 0 : index
    %12 = vector.load %arg5[%c0_9, %c0_10] : memref<1x128xf32, #tpu.memory_space<vmem>>, vector<1x128xf32>
    %13 = vector.broadcast %12 : vector<1x128xf32> to vector<64x128xf32>
    %14 = arith.addf %11, %13 : vector<64x128xf32>
    %cst_11 = arith.constant 0.000000e+00 : f32
    %15 = vector.broadcast %cst_11 : f32 to vector<64x128xf32>
    %16 = arith.maximumf %14, %15 : vector<64x128xf32>
    %17 = arith.truncf %16 : vector<64x128xf32> to vector<64x128xbf16>
    %c0_12 = arith.constant 0 : index
    %c0_13 = arith.constant 0 : index
    %18 = vector.load %arg6[%c0_12, %c0_13] : memref<128x128xbf16, #tpu.memory_space<vmem>>, vector<128x128xbf16>
    %cst_14 = arith.constant dense<0.000000e+00> : vector<64x128xf32>
    %19 = tpu.matmul %17, %18, %cst_14 {dimension_numbers = #tpu.dot_dimension_numbers<[1], [0], [0], [1], [0, 0, 1, 1], [], []>} : vector<64x128xbf16>, vector<128x128xbf16>, vector<64x128xf32> -> vector<64x128xf32>
    %c0_15 = arith.constant 0 : index
    %c0_16 = arith.constant 0 : index
    %20 = vector.load %arg7[%c0_15, %c0_16] : memref<1x128xf32, #tpu.memory_space<vmem>>, vector<1x128xf32>
    %21 = vector.broadcast %20 : vector<1x128xf32> to vector<64x128xf32>
    %22 = arith.addf %19, %21 : vector<64x128xf32>
    %cst_17 = arith.constant 0.000000e+00 : f32
    %23 = vector.broadcast %cst_17 : f32 to vector<64x128xf32>
    %24 = arith.maximumf %22, %23 : vector<64x128xf32>
    %25 = arith.truncf %24 : vector<64x128xf32> to vector<64x128xbf16>
    %c0_18 = arith.constant 0 : index
    %c0_19 = arith.constant 0 : index
    %26 = vector.load %arg8[%c0_18, %c0_19] : memref<128x128xbf16, #tpu.memory_space<vmem>>, vector<128x128xbf16>
    %cst_20 = arith.constant dense<0.000000e+00> : vector<64x128xf32>
    %27 = tpu.matmul %25, %26, %cst_20 {dimension_numbers = #tpu.dot_dimension_numbers<[1], [0], [0], [1], [0, 0, 1, 1], [], []>} : vector<64x128xbf16>, vector<128x128xbf16>, vector<64x128xf32> -> vector<64x128xf32>
    %c0_21 = arith.constant 0 : index
    %c0_22 = arith.constant 0 : index
    %28 = vector.load %arg9[%c0_21, %c0_22] : memref<1x128xf32, #tpu.memory_space<vmem>>, vector<1x128xf32>
    %29 = vector.broadcast %28 : vector<1x128xf32> to vector<64x128xf32>
    %30 = arith.addf %27, %29 : vector<64x128xf32>
    %c0_23 = arith.constant 0 : index
    %c0_24 = arith.constant 0 : index
    %31 = vector.load %arg10[%c0_23, %c0_24] : memref<64x128xf32, #tpu.memory_space<vmem>>, vector<64x128xf32>
    tpu.vector_store %arg10[%c0_23, %c0_24], %30 {strides = array<i32>} : memref<64x128xf32, #tpu.memory_space<vmem>>, vector<64x128xf32>,
    return
  }
  func.func @transform_0(%arg0: i32) -> (i32, i32) {
    %c0_i32 = arith.constant 0 : i32
    %c0_i32_0 = arith.constant 0 : i32
    return %arg0, %c0_i32 : i32, i32
  }
  func.func @transform_1(%arg0: i32) -> (i32, i32) {
    %c0_i32 = arith.constant 0 : i32
    %c0_i32_0 = arith.constant 0 : i32
    %c0_i32_1 = arith.constant 0 : i32
    return %c0_i32, %c0_i32_0 : i32, i32
  }
  func.func @transform_2(%arg0: i32) -> (i32, i32) {
    %c0_i32 = arith.constant 0 : i32
    %c0_i32_0 = arith.constant 0 : i32
    %c0_i32_1 = arith.constant 0 : i32
    return %c0_i32, %c0_i32_0 : i32, i32
  }
  func.func @transform_3(%arg0: i32) -> (i32, i32) {
    %c0_i32 = arith.constant 0 : i32
    %c0_i32_0 = arith.constant 0 : i32
    %c0_i32_1 = arith.constant 0 : i32
    return %c0_i32, %c0_i32_0 : i32, i32
  }
  func.func @transform_4(%arg0: i32) -> (i32, i32) {
    %c0_i32 = arith.constant 0 : i32
    %c0_i32_0 = arith.constant 0 : i32
    %c0_i32_1 = arith.constant 0 : i32
    return %c0_i32, %c0_i32_0 : i32, i32
  }
  func.func @transform_5(%arg0: i32) -> (i32, i32) {
    %c0_i32 = arith.constant 0 : i32
    %c0_i32_0 = arith.constant 0 : i32
    %c0_i32_1 = arith.constant 0 : i32
    return %c0_i32, %c0_i32_0 : i32, i32
  }
  func.func @transform_6(%arg0: i32) -> (i32, i32) {
    %c0_i32 = arith.constant 0 : i32
    %c0_i32_0 = arith.constant 0 : i32
    %c0_i32_1 = arith.constant 0 : i32
    return %c0_i32, %c0_i32_0 : i32, i32
  }
  func.func @transform_7(%arg0: i32) -> (i32, i32) {
    %c0_i32 = arith.constant 0 : i32
    %c0_i32_0 = arith.constant 0 : i32
    %c0_i32_1 = arith.constant 0 : i32
    return %c0_i32, %c0_i32_0 : i32, i32
  }
  func.func @transform_8(%arg0: i32) -> (i32, i32) {
    %c0_i32 = arith.constant 0 : i32
    %c0_i32_0 = arith.constant 0 : i32
    %c0_i32_1 = arith.constant 0 : i32
    return %c0_i32, %c0_i32_0 : i32, i32
  }
  func.func @transform_9(%arg0: i32) -> (i32, i32) {
    %c0_i32 = arith.constant 0 : i32
    %c0_i32_0 = arith.constant 0 : i32
    return %arg0, %c0_i32 : i32, i32
  }
}

</mosaic_0001>

<llo_original>
// kernel: tpu_custom_call.1
$region0: #{tpu_custom_call.1}
  #allocation0 [shape = 'u32[]', space=smem, size = 0x4, offset = 0x4, fixed_abs, tag = 'smem constant byte address 0x4 - core index']
  #allocation1 [shape = 'u32[144,128]{1,0:T(1,128)}', space=vmem, size = 0x12000, scoped, tag = 'internal scratch']
  %s0 = inlined_call_operand.hbm [shape: f32[64,128], index: 0, kind: input, shape index: {}]
  %s1 = inlined_call_operand.hbm [shape: bf16[128,128], index: 1, kind: input, shape index: {}]
  %s2 = inlined_call_operand.vmem [shape: f32[1,128], index: 2, kind: input, shape index: {}]
  %s3 = inlined_call_operand.hbm [shape: bf16[128,128], index: 3, kind: input, shape index: {}]
  %s4 = inlined_call_operand.vmem [shape: f32[1,128], index: 4, kind: input, shape index: {}]
  %s5 = inlined_call_operand.hbm [shape: bf16[128,128], index: 5, kind: input, shape index: {}]
  %s6 = inlined_call_operand.vmem [shape: f32[1,128], index: 6, kind: input, shape index: {}]
  %s7 = inlined_call_operand.hbm [shape: bf16[128,128], index: 7, kind: input, shape index: {}]
  %s8 = inlined_call_operand.vmem [shape: f32[1,128], index: 8, kind: input, shape index: {}]
  %s9 = inlined_call_operand.hbm [shape: f32[64,128], index: 9, kind: output, shape index: {}]
  %s10 = sld [smem:[#allocation0]]
  $region66: #{tpu_custom_call.1} parent=0
    _
  %s12 = ssub.s32 1, %s10
  %s13 = scalar_select 0, %s12, %s10
  $region1: #{tpu_custom_call.1} parent=0
    #allocation2 [shape = 'u8[32768]{0}', space=vmem, size = 0x8000, scoped, tag = 'input window, operand 0, single buffered']
    #allocation3 [shape = 's32[1]{0}', space=sflag, size = 0x4, scoped, tag = 'scoped memory for tpu_custom_call.1']
    #allocation4 [shape = 's32[1]{0}', space=sflag, size = 0x4, scoped, tag = 'scoped memory for tpu_custom_call.1']
    #allocation5 [shape = 'u8[32768]{0}', space=vmem, size = 0x8000, scoped, tag = 'input window, operand 1, single buffered']
    #allocation6 [shape = 's32[1]{0}', space=sflag, size = 0x4, scoped, tag = 'scoped memory for tpu_custom_call.1']
    #allocation7 [shape = 'u8[32768]{0}', space=vmem, size = 0x8000, scoped, tag = 'input window, operand 3, single buffered']
    #allocation8 [shape = 'u8[32768]{0}', space=vmem, size = 0x8000, scoped, tag = 'input window, operand 5, single buffered']
    #allocation9 [shape = 's32[1]{0}', space=sflag, size = 0x4, scoped, tag = 'scoped memory for tpu_custom_call.1']
    #allocation10 [shape = 'u8[32768]{0}', space=vmem, size = 0x8000, scoped, tag = 'input window, operand 7, single buffered']
    #allocation11 [shape = 'u8[32768]{0}', space=vmem, size = 0x8000, scoped, tag = 'output window, operand 0, single buffered']
    %14 = vsyncpa [#allocation3], 0
    %15 = vsyncpa [#allocation6], 0
    %16 = vsyncpa [#allocation9], 0
    %17 = vsyncpa [#allocation4], 0
    // Predicated region
    $region2: #{tpu_custom_call.1} parent=1 // pred_check
      _
    $region3: #{tpu_custom_call.1} parent=1 // pred_check_branch
      %19 = sbr.rel (0) target = $region5
    $region4: #{tpu_custom_call.1} parent=1 // pred_region
      %s21 = ssub.s32 1024, 1024
      %22 = vsyncadd [#allocation3], %s21
      %s23 = sshll.u32 [#allocation2], 4
      %s24 = int_to_ptr.vmem [resolvable:$true] %s23
      %29 = dma.hbm_to_vmem [thread:$0]  %s0, 1024, %s24, [#allocation3], 128, 128, 8
    $region5: #{tpu_custom_call.1} parent=1 // pred_fallthru
      _
    // Predicated region
    $region6: #{tpu_custom_call.1} parent=1 // pred_check
      _
    $region7: #{tpu_custom_call.1} parent=1 // pred_check_branch
      %31 = sbr.rel (0) target = $region9
    $region8: #{tpu_custom_call.1} parent=1 // pred_region
      %s33 = ssub.s32 1024, 1024
      %34 = vsyncadd [#allocation6], %s33
      %s35 = sshll.u32 [#allocation5], 4
      %s36 = int_to_ptr.vmem [resolvable:$true] %s35
      %41 = dma.hbm_to_vmem [thread:$0]  %s1, 1024, %s36, [#allocation6], 64, 64, 4
    $region9: #{tpu_custom_call.1} parent=1 // pred_fallthru
      _
    // Predicated region
    $region10: #{tpu_custom_call.1} parent=1 // pred_check
      _
    $region11: #{tpu_custom_call.1} parent=1 // pred_check_branch
      %43 = sbr.rel (0) target = $region13
    $region12: #{tpu_custom_call.1} parent=1 // pred_region
      _
    $region13: #{tpu_custom_call.1} parent=1 // pred_fallthru
      _
    // Predicated region
    $region14: #{tpu_custom_call.1} parent=1 // pred_check
      _
    $region15: #{tpu_custom_call.1} parent=1 // pred_check_branch
      %45 = sbr.rel (0) target = $region17
    $region16: #{tpu_custom_call.1} parent=1 // pred_region
      %s47 = ssub.s32 1024, 1024
      %48 = vsyncadd [#allocation6], %s47
      %s49 = sshll.u32 [#allocation7], 4
      %s50 = int_to_ptr.vmem [resolvable:$true] %s49
      %55 = dma.hbm_to_vmem [thread:$0]  %s3, 1024, %s50, [#allocation6], 64, 64, 4
    $region17: #{tpu_custom_call.1} parent=1 // pred_fallthru
      _
    // Predicated region
    $region18: #{tpu_custom_call.1} parent=1 // pred_check
      _
    $region19: #{tpu_custom_call.1} parent=1 // pred_check_branch
      %57 = sbr.rel (0) target = $region21
    $region20: #{tpu_custom_call.1} parent=1 // pred_region
      _
    $region21: #{tpu_custom_call.1} parent=1 // pred_fallthru
      _
    // Predicated region
    $region22: #{tpu_custom_call.1} parent=1 // pred_check
      _
    $region23: #{tpu_custom_call.1} parent=1 // pred_check_branch
      %59 = sbr.rel (0) target = $region25
    $region24: #{tpu_custom_call.1} parent=1 // pred_region
      %s61 = ssub.s32 1024, 1024
      %62 = vsyncadd [#allocation9], %s61
      %s63 = sshll.u32 [#allocation8], 4
      %s64 = int_to_ptr.vmem [resolvable:$true] %s63
      %69 = dma.hbm_to_vmem [thread:$0]  %s5, 1024, %s64, [#allocation9], 64, 64, 4
    $region25: #{tpu_custom_call.1} parent=1 // pred_fallthru
      _
    // Predicated region
    $region26: #{tpu_custom_call.1} parent=1 // pred_check
      _
    $region27: #{tpu_custom_call.1} parent=1 // pred_check_branch
      %71 = sbr.rel (0) target = $region29
    $region28: #{tpu_custom_call.1} parent=1 // pred_region
      _
    $region29: #{tpu_custom_call.1} parent=1 // pred_fallthru
      _
    // Predicated region
    $region30: #{tpu_custom_call.1} parent=1 // pred_check
      _
    $region31: #{tpu_custom_call.1} parent=1 // pred_check_branch
      %73 = sbr.rel (0) target = $region33
    $region32: #{tpu_custom_call.1} parent=1 // pred_region
      %s75 = ssub.s32 1024, 1024
      %76 = vsyncadd [#allocation9], %s75
      %s77 = sshll.u32 [#allocation10], 4
      %s78 = int_to_ptr.vmem [resolvable:$true] %s77
      %83 = dma.hbm_to_vmem [thread:$0]  %s7, 1024, %s78, [#allocation9], 64, 64, 4
    $region33: #{tpu_custom_call.1} parent=1 // pred_fallthru
      _
    // Predicated region
    $region34: #{tpu_custom_call.1} parent=1 // pred_check
      _
    $region35: #{tpu_custom_call.1} parent=1 // pred_check_branch
      %85 = sbr.rel (0) target = $region37
    $region36: #{tpu_custom_call.1} parent=1 // pred_region
      _
    $region37: #{tpu_custom_call.1} parent=1 // pred_fallthru
      _
    // Predicated region
    $region38: #{tpu_custom_call.1} parent=1 // pred_check
      _
    $region39: #{tpu_custom_call.1} parent=1 // pred_check_branch
      %87 = sbr.rel (0) target = $region41
    $region40: #{tpu_custom_call.1} parent=1 // pred_region
      %88 = dma.done [#allocation3], 1024
    $region41: #{tpu_custom_call.1} parent=1 // pred_fallthru
      _
    // Predicated region
    $region42: #{tpu_custom_call.1} parent=1 // pred_check
      _
    $region43: #{tpu_custom_call.1} parent=1 // pred_check_branch
      %90 = sbr.rel (0) target = $region45
    $region44: #{tpu_custom_call.1} parent=1 // pred_region
      %91 = dma.done [#allocation6], 1024
    $region45: #{tpu_custom_call.1} parent=1 // pred_fallthru
      _
    // Predicated region
    $region46: #{tpu_custom_call.1} parent=1 // pred_check
      _
    $region47: #{tpu_custom_call.1} parent=1 // pred_check_branch
      %93 = sbr.rel (0) target = $region49
    $region48: #{tpu_custom_call.1} parent=1 // pred_region
      %94 = dma.done [#allocation6], 1024
    $region49: #{tpu_custom_call.1} parent=1 // pred_fallthru
      _
    // Predicated region
    $region50: #{tpu_custom_call.1} parent=1 // pred_check
      _
    $region51: #{tpu_custom_call.1} parent=1 // pred_check_branch
      %96 = sbr.rel (0) target = $region53
    $region52: #{tpu_custom_call.1} parent=1 // pred_region
      %97 = dma.done [#allocation9], 1024
    $region53: #{tpu_custom_call.1} parent=1 // pred_fallthru
      _
    // Predicated region
    $region54: #{tpu_custom_call.1} parent=1 // pred_check
      _
    $region55: #{tpu_custom_call.1} parent=1 // pred_check_branch
      %99 = sbr.rel (0) target = $region57
    $region56: #{tpu_custom_call.1} parent=1 // pred_region
      %100 = dma.done [#allocation9], 1024
    $region57: #{tpu_custom_call.1} parent=1 // pred_fallthru
      _
    %v102 = vld [vmem:[#allocation2] sm:$0xff]
    %v103 = vld [vmem:[#allocation2 + $0x8] sm:$0xff]
    %v104 = vld [vmem:[#allocation2 + $0x10] sm:$0xff]
    %v105 = vld [vmem:[#allocation2 + $0x18] sm:$0xff]
    %v106 = vld [vmem:[#allocation2 + $0x20] sm:$0xff]
    %v107 = vld [vmem:[#allocation2 + $0x28] sm:$0xff]
    %v108 = vld [vmem:[#allocation2 + $0x30] sm:$0xff]
    %v109 = vld [vmem:[#allocation2 + $0x38] sm:$0xff]
    %v110 = vpack.c.bf16 %v103, %v102
    %v111 = vpack.c.bf16 %v105, %v104
    %v112 = vpack.c.bf16 %v107, %v106
    %v113 = vpack.c.bf16 %v109, %v108
    %v114 = vld [vmem:[#allocation5] sm:$0xf]
    %v115 = vld [vmem:[#allocation5 + $0x4] sm:$0xf]
    %v116 = vld [vmem:[#allocation5 + $0x8] sm:$0xf]
    %v117 = vld [vmem:[#allocation5 + $0xc] sm:$0xf]
    %v118 = vld [vmem:[#allocation5 + $0x10] sm:$0xf]
    %v119 = vld [vmem:[#allocation5 + $0x14] sm:$0xf]
    %v120 = vld [vmem:[#allocation5 + $0x18] sm:$0xf]
    %v121 = vld [vmem:[#allocation5 + $0x1c] sm:$0xf]
    %v122 = vld [vmem:[#allocation5 + $0x20] sm:$0xf]
    %v123 = vld [vmem:[#allocation5 + $0x24] sm:$0xf]
    %v124 = vld [vmem:[#allocation5 + $0x28] sm:$0xf]
    %v125 = vld [vmem:[#allocation5 + $0x2c] sm:$0xf]
    %v126 = vld [vmem:[#allocation5 + $0x30] sm:$0xf]
    %v127 = vld [vmem:[#allocation5 + $0x34] sm:$0xf]
    %v128 = vld [vmem:[#allocation5 + $0x38] sm:$0xf]
    %v129 = vld [vmem:[#allocation5 + $0x3c] sm:$0xf]
    %v130 = vld [vmem:[%s2] sm:$0x1]
    %v132 = vlaneseq
    %v133 = vshrl.u32 %v132, 7
    %v134 = vsub.s32 0, %v133
    %v135 = vrot.slane %v130, %v134
    %v153 = vunpack.c.l.b16 %v114
    %v154 = vunpack.c.l.b16 %v115
    %v155 = vunpack.c.l.b16 %v116
    %v156 = vunpack.c.l.b16 %v117
    %v157 = vunpack.c.l.b16 %v118
    %v158 = vunpack.c.l.b16 %v119
    %v159 = vunpack.c.l.b16 %v120
    %v160 = vunpack.c.l.b16 %v121
    %v161 = vunpack.c.l.b16 %v122
    %v162 = vunpack.c.l.b16 %v123
    %v163 = vunpack.c.l.b16 %v124
    %v164 = vunpack.c.l.b16 %v125
    %v165 = vunpack.c.l.b16 %v126
    %v166 = vunpack.c.l.b16 %v127
    %v167 = vunpack.c.l.b16 %v128
    %v168 = vunpack.c.l.b16 %v129
    %v169 = vpack.c.b16 %v154, %v153
    %v170 = vpack.c.b16 %v156, %v155
    %v171 = vpack.c.b16 %v158, %v157
    %v172 = vpack.c.b16 %v160, %v159
    %v173 = vpack.c.b16 %v162, %v161
    %v174 = vpack.c.b16 %v164, %v163
    %v175 = vpack.c.b16 %v166, %v165
    %v176 = vpack.c.b16 %v168, %v167
    %185 = vmatprep.subr.bf16.mxu0 0
    %186 = vmatpush1.bf16.msra.mxu0 %v169
    %187 = vmatprep.subr.bf16.mxu0 0
    %188 = vmatpush1.bf16.msra.mxu0 %v170
    %189 = vmatprep.subr.bf16.mxu0 0
    %190 = vmatpush1.bf16.msra.mxu0 %v171
    %191 = vmatprep.subr.bf16.mxu0 0
    %192 = vmatpush1.bf16.msra.mxu0 %v172
    %193 = vmatprep.subr.bf16.mxu0 0
    %194 = vmatpush1.bf16.msra.mxu0 %v173
    %195 = vmatprep.subr.bf16.mxu0 0
    %196 = vmatpush1.bf16.msra.mxu0 %v174
    %197 = vmatprep.subr.bf16.mxu0 0
    %198 = vmatpush1.bf16.msra.mxu0 %v175
    %199 = vmatprep.subr.bf16.mxu0 0
    %200 = vmatpush1.bf16.msra.mxu0 %v176
    %201 = vmatprep.subr.bf16.mxu0 0
    %202 = vmatpush1.bf16.msra.mxu0 0
    %203 = vmatprep.subr.bf16.mxu0 0
    %204 = vmatpush1.bf16.msra.mxu0 0
    %205 = vmatprep.subr.bf16.mxu0 0
    %206 = vmatpush1.bf16.msra.mxu0 0
    %207 = vmatprep.subr.bf16.mxu0 0
    %208 = vmatpush1.bf16.msra.mxu0 0
    %209 = vmatprep.subr.bf16.mxu0 0
    %210 = vmatpush1.bf16.msra.mxu0 0
    %211 = vmatprep.subr.bf16.mxu0 0
    %212 = vmatpush1.bf16.msra.mxu0 0
    %213 = vmatprep.subr.bf16.mxu0 0
    %214 = vmatpush1.bf16.msra.mxu0 0
    %215 = vmatprep.subr.bf16.mxu0 0
    %216 = vmatpush1.bf16.msra.mxu0 0
    %217 = vmatprep.mubr.bf16.mxu0 0
    %218 = vmatmul.mubr.bf16.gmra.mrb[0].mxu0 %v110
    %v219 = vpop.f32.mrb[0].mxu0
    %v220 = vadd.f32 %v135, %v219
    %v221 = vpop.f32.mrb[0].mxu0
    %v222 = vpop.f32.mrb[0].mxu0
    %v223 = vadd.f32 %v135, %v222
    %v224 = vpop.f32.mrb[0].mxu0
    %225 = vmatprep.mubr.bf16.mxu0 0
    %226 = vmatmul.mubr.bf16.gmra.mrb[0].mxu0 %v111
    %v227 = vpop.f32.mrb[0].mxu0
    %v228 = vadd.f32 %v135, %v227
    %v229 = vpop.f32.mrb[0].mxu0
    %v230 = vpop.f32.mrb[0].mxu0
    %v231 = vadd.f32 %v135, %v230
    %v232 = vpop.f32.mrb[0].mxu0
    %233 = vmatprep.mubr.bf16.mxu0 0
    %234 = vmatmul.mubr.bf16.gmra.mrb[0].mxu0 %v112
    %v235 = vpop.f32.mrb[0].mxu0
    %v236 = vadd.f32 %v135, %v235
    %v237 = vpop.f32.mrb[0].mxu0
    %v238 = vpop.f32.mrb[0].mxu0
    %v239 = vadd.f32 %v135, %v238
    %v240 = vpop.f32.mrb[0].mxu0
    %241 = vmatprep.mubr.bf16.mxu0 0
    %242 = vmatmul.mubr.bf16.gmra.mrb[0].mxu0 %v113
    %v243 = vpop.f32.mrb[0].mxu0
    %v244 = vadd.f32 %v135, %v243
    %v245 = vpop.f32.mrb[0].mxu0
    %v246 = vpop.f32.mrb[0].mxu0
    %v247 = vadd.f32 %v135, %v246
    %v248 = vpop.f32.mrb[0].mxu0
    %249 = vdwg.mxu0
    %v250 = vmax.f32 %v220, 0.0
    %v251 = vmax.f32 %v223, 0.0
    %v252 = vmax.f32 %v228, 0.0
    %v253 = vmax.f32 %v231, 0.0
    %v254 = vmax.f32 %v236, 0.0
    %v255 = vmax.f32 %v239, 0.0
    %v256 = vmax.f32 %v244, 0.0
    %v257 = vmax.f32 %v247, 0.0
    %v258 = vpack.c.bf16 %v251, %v250
    %v259 = vpack.c.bf16 %v253, %v252
    %v260 = vpack.c.bf16 %v255, %v254
    %v261 = vpack.c.bf16 %v257, %v256
    %v262 = vld [vmem:[#allocation7] sm:$0xf]
    %v263 = vld [vmem:[#allocation7 + $0x4] sm:$0xf]
    %v264 = vld [vmem:[#allocation7 + $0x8] sm:$0xf]
    %v265 = vld [vmem:[#allocation7 + $0xc] sm:$0xf]
    %v266 = vld [vmem:[#allocation7 + $0x10] sm:$0xf]
    %v267 = vld [vmem:[#allocation7 + $0x14] sm:$0xf]
    %v268 = vld [vmem:[#allocation7 + $0x18] sm:$0xf]
    %v269 = vld [vmem:[#allocation7 + $0x1c] sm:$0xf]
    %v270 = vld [vmem:[#allocation7 + $0x20] sm:$0xf]
    %v271 = vld [vmem:[#allocation7 + $0x24] sm:$0xf]
    %v272 = vld [vmem:[#allocation7 + $0x28] sm:$0xf]
    %v273 = vld [vmem:[#allocation7 + $0x2c] sm:$0xf]
    %v274 = vld [vmem:[#allocation7 + $0x30] sm:$0xf]
    %v275 = vld [vmem:[#allocation7 + $0x34] sm:$0xf]
    %v276 = vld [vmem:[#allocation7 + $0x38] sm:$0xf]
    %v277 = vld [vmem:[#allocation7 + $0x3c] sm:$0xf]
    %v278 = vld [vmem:[%s4] sm:$0x1]
    %v280 = vlaneseq
    %v281 = vshrl.u32 %v280, 7
    %v282 = vsub.s32 0, %v281
    %v283 = vrot.slane %v278, %v282
    %v301 = vunpack.c.l.b16 %v262
    %v302 = vunpack.c.l.b16 %v263
    %v303 = vunpack.c.l.b16 %v264
    %v304 = vunpack.c.l.b16 %v265
    %v305 = vunpack.c.l.b16 %v266
    %v306 = vunpack.c.l.b16 %v267
    %v307 = vunpack.c.l.b16 %v268
    %v308 = vunpack.c.l.b16 %v269
    %v309 = vunpack.c.l.b16 %v270
    %v310 = vunpack.c.l.b16 %v271
    %v311 = vunpack.c.l.b16 %v272
    %v312 = vunpack.c.l.b16 %v273
    %v313 = vunpack.c.l.b16 %v274
    %v314 = vunpack.c.l.b16 %v275
    %v315 = vunpack.c.l.b16 %v276
    %v316 = vunpack.c.l.b16 %v277
    %v317 = vpack.c.b16 %v302, %v301
    %v318 = vpack.c.b16 %v304, %v303
    %v319 = vpack.c.b16 %v306, %v305
    %v320 = vpack.c.b16 %v308, %v307
    %v321 = vpack.c.b16 %v310, %v309
    %v322 = vpack.c.b16 %v312, %v311
    %v323 = vpack.c.b16 %v314, %v313
    %v324 = vpack.c.b16 %v316, %v315
    %333 = vmatprep.subr.bf16.mxu0 0
    %334 = vmatpush1.bf16.msra.mxu0 %v317
    %335 = vmatprep.subr.bf16.mxu0 0
    %336 = vmatpush1.bf16.msra.mxu0 %v318
    %337 = vmatprep.subr.bf16.mxu0 0
    %338 = vmatpush1.bf16.msra.mxu0 %v319
    %339 = vmatprep.subr.bf16.mxu0 0
    %340 = vmatpush1.bf16.msra.mxu0 %v320
    %341 = vmatprep.subr.bf16.mxu0 0
    %342 = vmatpush1.bf16.msra.mxu0 %v321
    %343 = vmatprep.subr.bf16.mxu0 0
    %344 = vmatpush1.bf16.msra.mxu0 %v322
    %345 = vmatprep.subr.bf16.mxu0 0
    %346 = vmatpush1.bf16.msra.mxu0 %v323
    %347 = vmatprep.subr.bf16.mxu0 0
    %348 = vmatpush1.bf16.msra.mxu0 %v324
    %349 = vmatprep.subr.bf16.mxu0 0
    %350 = vmatpush1.bf16.msra.mxu0 0
    %351 = vmatprep.subr.bf16.mxu0 0
    %352 = vmatpush1.bf16.msra.mxu0 0
    %353 = vmatprep.subr.bf16.mxu0 0
    %354 = vmatpush1.bf16.msra.mxu0 0
    %355 = vmatprep.subr.bf16.mxu0 0
    %356 = vmatpush1.bf16.msra.mxu0 0
    %357 = vmatprep.subr.bf16.mxu0 0
    %358 = vmatpush1.bf16.msra.mxu0 0
    %359 = vmatprep.subr.bf16.mxu0 0
    %360 = vmatpush1.bf16.msra.mxu0 0
    %361 = vmatprep.subr.bf16.mxu0 0
    %362 = vmatpush1.bf16.msra.mxu0 0
    %363 = vmatprep.subr.bf16.mxu0 0
    %364 = vmatpush1.bf16.msra.mxu0 0
    %365 = vmatprep.mubr.bf16.mxu0 0
    %366 = vmatmul.mubr.bf16.gmra.mrb[0].mxu0 %v258
    %v367 = vpop.f32.mrb[0].mxu0
    %v368 = vadd.f32 %v283, %v367
    %v369 = vpop.f32.mrb[0].mxu0
    %v370 = vpop.f32.mrb[0].mxu0
    %v371 = vadd.f32 %v283, %v370
    %v372 = vpop.f32.mrb[0].mxu0
    %373 = vmatprep.mubr.bf16.mxu0 0
    %374 = vmatmul.mubr.bf16.gmra.mrb[0].mxu0 %v259
    %v375 = vpop.f32.mrb[0].mxu0
    %v376 = vadd.f32 %v283, %v375
    %v377 = vpop.f32.mrb[0].mxu0
    %v378 = vpop.f32.mrb[0].mxu0
    %v379 = vadd.f32 %v283, %v378
    %v380 = vpop.f32.mrb[0].mxu0
    %381 = vmatprep.mubr.bf16.mxu0 0
    %382 = vmatmul.mubr.bf16.gmra.mrb[0].mxu0 %v260
    %v383 = vpop.f32.mrb[0].mxu0
    %v384 = vadd.f32 %v283, %v383
    %v385 = vpop.f32.mrb[0].mxu0
    %v386 = vpop.f32.mrb[0].mxu0
    %v387 = vadd.f32 %v283, %v386
    %v388 = vpop.f32.mrb[0].mxu0
    %389 = vmatprep.mubr.bf16.mxu0 0
    %390 = vmatmul.mubr.bf16.gmra.mrb[0].mxu0 %v261
    %v391 = vpop.f32.mrb[0].mxu0
    %v392 = vadd.f32 %v283, %v391
    %v393 = vpop.f32.mrb[0].mxu0
    %v394 = vpop.f32.mrb[0].mxu0
    %v395 = vadd.f32 %v283, %v394
    %v396 = vpop.f32.mrb[0].mxu0
    %397 = vdwg.mxu0
    %v398 = vmax.f32 %v368, 0.0
    %v399 = vmax.f32 %v371, 0.0
    %v400 = vmax.f32 %v376, 0.0
    %v401 = vmax.f32 %v379, 0.0
    %v402 = vmax.f32 %v384, 0.0
    %v403 = vmax.f32 %v387, 0.0
    %v404 = vmax.f32 %v392, 0.0
    %v405 = vmax.f32 %v395, 0.0
    %v406 = vpack.c.bf16 %v399, %v398
    %v407 = vpack.c.bf16 %v401, %v400
    %v408 = vpack.c.bf16 %v403, %v402
    %v409 = vpack.c.bf16 %v405, %v404
    %v410 = vld [vmem:[#allocation8] sm:$0xf]
    %v411 = vld [vmem:[#allocation8 + $0x4] sm:$0xf]
    %v412 = vld [vmem:[#allocation8 + $0x8] sm:$0xf]
    %v413 = vld [vmem:[#allocation8 + $0xc] sm:$0xf]
    %v414 = vld [vmem:[#allocation8 + $0x10] sm:$0xf]
    %v415 = vld [vmem:[#allocation8 + $0x14] sm:$0xf]
    %v416 = vld [vmem:[#allocation8 + $0x18] sm:$0xf]
    %v417 = vld [vmem:[#allocation8 + $0x1c] sm:$0xf]
    %v418 = vld [vmem:[#allocation8 + $0x20] sm:$0xf]
    %v419 = vld [vmem:[#allocation8 + $0x24] sm:$0xf]
    %v420 = vld [vmem:[#allocation8 + $0x28] sm:$0xf]
    %v421 = vld [vmem:[#allocation8 + $0x2c] sm:$0xf]
    %v422 = vld [vmem:[#allocation8 + $0x30] sm:$0xf]
    %v423 = vld [vmem:[#allocation8 + $0x34] sm:$0xf]
    %v424 = vld [vmem:[#allocation8 + $0x38] sm:$0xf]
    %v425 = vld [vmem:[#allocation8 + $0x3c] sm:$0xf]
    %v426 = vld [vmem:[%s6] sm:$0x1]
    %v428 = vlaneseq
    %v429 = vshrl.u32 %v428, 7
    %v430 = vsub.s32 0, %v429
    %v431 = vrot.slane %v426, %v430
    %v449 = vunpack.c.l.b16 %v410
    %v450 = vunpack.c.l.b16 %v411
    %v451 = vunpack.c.l.b16 %v412
    %v452 = vunpack.c.l.b16 %v413
    %v453 = vunpack.c.l.b16 %v414
    %v454 = vunpack.c.l.b16 %v415
    %v455 = vunpack.c.l.b16 %v416
    %v456 = vunpack.c.l.b16 %v417
    %v457 = vunpack.c.l.b16 %v418
    %v458 = vunpack.c.l.b16 %v419
    %v459 = vunpack.c.l.b16 %v420
    %v460 = vunpack.c.l.b16 %v421
    %v461 = vunpack.c.l.b16 %v422
    %v462 = vunpack.c.l.b16 %v423
    %v463 = vunpack.c.l.b16 %v424
    %v464 = vunpack.c.l.b16 %v425
    %v465 = vpack.c.b16 %v450, %v449
    %v466 = vpack.c.b16 %v452, %v451
    %v467 = vpack.c.b16 %v454, %v453
    %v468 = vpack.c.b16 %v456, %v455
    %v469 = vpack.c.b16 %v458, %v457
    %v470 = vpack.c.b16 %v460, %v459
    %v471 = vpack.c.b16 %v462, %v461
    %v472 = vpack.c.b16 %v464, %v463
    %481 = vmatprep.subr.bf16.mxu0 0
    %482 = vmatpush1.bf16.msra.mxu0 %v465
    %483 = vmatprep.subr.bf16.mxu0 0
    %484 = vmatpush1.bf16.msra.mxu0 %v466
    %485 = vmatprep.subr.bf16.mxu0 0
    %486 = vmatpush1.bf16.msra.mxu0 %v467
    %487 = vmatprep.subr.bf16.mxu0 0
    %488 = vmatpush1.bf16.msra.mxu0 %v468
    %489 = vmatprep.subr.bf16.mxu0 0
    %490 = vmatpush1.bf16.msra.mxu0 %v469
    %491 = vmatprep.subr.bf16.mxu0 0
    %492 = vmatpush1.bf16.msra.mxu0 %v470
    %493 = vmatprep.subr.bf16.mxu0 0
    %494 = vmatpush1.bf16.msra.mxu0 %v471
    %495 = vmatprep.subr.bf16.mxu0 0
    %496 = vmatpush1.bf16.msra.mxu0 %v472
    %497 = vmatprep.subr.bf16.mxu0 0
    %498 = vmatpush1.bf16.msra.mxu0 0
    %499 = vmatprep.subr.bf16.mxu0 0
    %500 = vmatpush1.bf16.msra.mxu0 0
    %501 = vmatprep.subr.bf16.mxu0 0
    %502 = vmatpush1.bf16.msra.mxu0 0
    %503 = vmatprep.subr.bf16.mxu0 0
    %504 = vmatpush1.bf16.msra.mxu0 0
    %505 = vmatprep.subr.bf16.mxu0 0
    %506 = vmatpush1.bf16.msra.mxu0 0
    %507 = vmatprep.subr.bf16.mxu0 0
    %508 = vmatpush1.bf16.msra.mxu0 0
    %509 = vmatprep.subr.bf16.mxu0 0
    %510 = vmatpush1.bf16.msra.mxu0 0
    %511 = vmatprep.subr.bf16.mxu0 0
    %512 = vmatpush1.bf16.msra.mxu0 0
    %513 = vmatprep.mubr.bf16.mxu0 0
    %514 = vmatmul.mubr.bf16.gmra.mrb[0].mxu0 %v406
    %v515 = vpop.f32.mrb[0].mxu0
    %v516 = vadd.f32 %v431, %v515
    %v517 = vpop.f32.mrb[0].mxu0
    %v518 = vpop.f32.mrb[0].mxu0
    %v519 = vadd.f32 %v431, %v518
    %v520 = vpop.f32.mrb[0].mxu0
    %521 = vmatprep.mubr.bf16.mxu0 0
    %522 = vmatmul.mubr.bf16.gmra.mrb[0].mxu0 %v407
    %v523 = vpop.f32.mrb[0].mxu0
    %v524 = vadd.f32 %v431, %v523
    %v525 = vpop.f32.mrb[0].mxu0
    %v526 = vpop.f32.mrb[0].mxu0
    %v527 = vadd.f32 %v431, %v526
    %v528 = vpop.f32.mrb[0].mxu0
    %529 = vmatprep.mubr.bf16.mxu0 0
    %530 = vmatmul.mubr.bf16.gmra.mrb[0].mxu0 %v408
    %v531 = vpop.f32.mrb[0].mxu0
    %v532 = vadd.f32 %v431, %v531
    %v533 = vpop.f32.mrb[0].mxu0
    %v534 = vpop.f32.mrb[0].mxu0
    %v535 = vadd.f32 %v431, %v534
    %v536 = vpop.f32.mrb[0].mxu0
    %537 = vmatprep.mubr.bf16.mxu0 0
    %538 = vmatmul.mubr.bf16.gmra.mrb[0].mxu0 %v409
    %v539 = vpop.f32.mrb[0].mxu0
    %v540 = vadd.f32 %v431, %v539
    %v541 = vpop.f32.mrb[0].mxu0
    %v542 = vpop.f32.mrb[0].mxu0
    %v543 = vadd.f32 %v431, %v542
    %v544 = vpop.f32.mrb[0].mxu0
    %545 = vdwg.mxu0
    %v546 = vmax.f32 %v516, 0.0
    %v547 = vmax.f32 %v519, 0.0
    %v548 = vmax.f32 %v524, 0.0
    %v549 = vmax.f32 %v527, 0.0
    %v550 = vmax.f32 %v532, 0.0
    %v551 = vmax.f32 %v535, 0.0
    %v552 = vmax.f32 %v540, 0.0
    %v553 = vmax.f32 %v543, 0.0
    %v554 = vpack.c.bf16 %v547, %v546
    %v555 = vpack.c.bf16 %v549, %v548
    %v556 = vpack.c.bf16 %v551, %v550
    %v557 = vpack.c.bf16 %v553, %v552
    %v558 = vld [vmem:[#allocation10] sm:$0xf]
    %v559 = vld [vmem:[#allocation10 + $0x4] sm:$0xf]
    %v560 = vld [vmem:[#allocation10 + $0x8] sm:$0xf]
    %v561 = vld [vmem:[#allocation10 + $0xc] sm:$0xf]
    %v562 = vld [vmem:[#allocation10 + $0x10] sm:$0xf]
    %v563 = vld [vmem:[#allocation10 + $0x14] sm:$0xf]
    %v564 = vld [vmem:[#allocation10 + $0x18] sm:$0xf]
    %v565 = vld [vmem:[#allocation10 + $0x1c] sm:$0xf]
    %v566 = vld [vmem:[#allocation10 + $0x20] sm:$0xf]
    %v567 = vld [vmem:[#allocation10 + $0x24] sm:$0xf]
    %v568 = vld [vmem:[#allocation10 + $0x28] sm:$0xf]
    %v569 = vld [vmem:[#allocation10 + $0x2c] sm:$0xf]
    %v570 = vld [vmem:[#allocation10 + $0x30] sm:$0xf]
    %v571 = vld [vmem:[#allocation10 + $0x34] sm:$0xf]
    %v572 = vld [vmem:[#allocation10 + $0x38] sm:$0xf]
    %v573 = vld [vmem:[#allocation10 + $0x3c] sm:$0xf]
    %v574 = vld [vmem:[%s8] sm:$0x1]
    %v576 = vlaneseq
    %v577 = vshrl.u32 %v576, 7
    %v578 = vsub.s32 0, %v577
    %v579 = vrot.slane %v574, %v578
    %v597 = vunpack.c.l.b16 %v558
    %v598 = vunpack.c.l.b16 %v559
    %v599 = vunpack.c.l.b16 %v560
    %v600 = vunpack.c.l.b16 %v561
    %v601 = vunpack.c.l.b16 %v562
    %v602 = vunpack.c.l.b16 %v563
    %v603 = vunpack.c.l.b16 %v564
    %v604 = vunpack.c.l.b16 %v565
    %v605 = vunpack.c.l.b16 %v566
    %v606 = vunpack.c.l.b16 %v567
    %v607 = vunpack.c.l.b16 %v568
    %v608 = vunpack.c.l.b16 %v569
    %v609 = vunpack.c.l.b16 %v570
    %v610 = vunpack.c.l.b16 %v571
    %v611 = vunpack.c.l.b16 %v572
    %v612 = vunpack.c.l.b16 %v573
    %v613 = vpack.c.b16 %v598, %v597
    %v614 = vpack.c.b16 %v600, %v599
    %v615 = vpack.c.b16 %v602, %v601
    %v616 = vpack.c.b16 %v604, %v603
    %v617 = vpack.c.b16 %v606, %v605
    %v618 = vpack.c.b16 %v608, %v607
    %v619 = vpack.c.b16 %v610, %v609
    %v620 = vpack.c.b16 %v612, %v611
    %629 = vmatprep.subr.bf16.mxu0 0
    %630 = vmatpush1.bf16.msra.mxu0 %v613
    %631 = vmatprep.subr.bf16.mxu0 0
    %632 = vmatpush1.bf16.msra.mxu0 %v614
    %633 = vmatprep.subr.bf16.mxu0 0
    %634 = vmatpush1.bf16.msra.mxu0 %v615
    %635 = vmatprep.subr.bf16.mxu0 0
    %636 = vmatpush1.bf16.msra.mxu0 %v616
    %637 = vmatprep.subr.bf16.mxu0 0
    %638 = vmatpush1.bf16.msra.mxu0 %v617
    %639 = vmatprep.subr.bf16.mxu0 0
    %640 = vmatpush1.bf16.msra.mxu0 %v618
    %641 = vmatprep.subr.bf16.mxu0 0
    %642 = vmatpush1.bf16.msra.mxu0 %v619
    %643 = vmatprep.subr.bf16.mxu0 0
    %644 = vmatpush1.bf16.msra.mxu0 %v620
    %645 = vmatprep.subr.bf16.mxu0 0
    %646 = vmatpush1.bf16.msra.mxu0 0
    %647 = vmatprep.subr.bf16.mxu0 0
    %648 = vmatpush1.bf16.msra.mxu0 0
    %649 = vmatprep.subr.bf16.mxu0 0
    %650 = vmatpush1.bf16.msra.mxu0 0
    %651 = vmatprep.subr.bf16.mxu0 0
    %652 = vmatpush1.bf16.msra.mxu0 0
    %653 = vmatprep.subr.bf16.mxu0 0
    %654 = vmatpush1.bf16.msra.mxu0 0
    %655 = vmatprep.subr.bf16.mxu0 0
    %656 = vmatpush1.bf16.msra.mxu0 0
    %657 = vmatprep.subr.bf16.mxu0 0
    %658 = vmatpush1.bf16.msra.mxu0 0
    %659 = vmatprep.subr.bf16.mxu0 0
    %660 = vmatpush1.bf16.msra.mxu0 0
    %661 = vmatprep.mubr.bf16.mxu0 0
    %662 = vmatmul.mubr.bf16.gmra.mrb[0].mxu0 %v554
    %v663 = vpop.f32.mrb[0].mxu0
    %v664 = vadd.f32 %v579, %v663
    %v665 = vpop.f32.mrb[0].mxu0
    %v666 = vpop.f32.mrb[0].mxu0
    %v667 = vadd.f32 %v579, %v666
    %v668 = vpop.f32.mrb[0].mxu0
    %669 = vmatprep.mubr.bf16.mxu0 0
    %670 = vmatmul.mubr.bf16.gmra.mrb[0].mxu0 %v555
    %v671 = vpop.f32.mrb[0].mxu0
    %v672 = vadd.f32 %v579, %v671
    %v673 = vpop.f32.mrb[0].mxu0
    %v674 = vpop.f32.mrb[0].mxu0
    %v675 = vadd.f32 %v579, %v674
    %v676 = vpop.f32.mrb[0].mxu0
    %677 = vmatprep.mubr.bf16.mxu0 0
    %678 = vmatmul.mubr.bf16.gmra.mrb[0].mxu0 %v556
    %v679 = vpop.f32.mrb[0].mxu0
    %v680 = vadd.f32 %v579, %v679
    %v681 = vpop.f32.mrb[0].mxu0
    %v682 = vpop.f32.mrb[0].mxu0
    %v683 = vadd.f32 %v579, %v682
    %v684 = vpop.f32.mrb[0].mxu0
    %685 = vmatprep.mubr.bf16.mxu0 0
    %686 = vmatmul.mubr.bf16.gmra.mrb[0].mxu0 %v557
    %v687 = vpop.f32.mrb[0].mxu0
    %v688 = vadd.f32 %v579, %v687
    %v689 = vpop.f32.mrb[0].mxu0
    %v690 = vpop.f32.mrb[0].mxu0
    %v691 = vadd.f32 %v579, %v690
    %v692 = vpop.f32.mrb[0].mxu0
    %693 = vdwg.mxu0
    %694 = vst [vmem:[#allocation11] sm:$0xff] %v664
    %695 = vst [vmem:[#allocation11 + $0x8] sm:$0xff] %v667
    %696 = vst [vmem:[#allocation11 + $0x10] sm:$0xff] %v672
    %697 = vst [vmem:[#allocation11 + $0x18] sm:$0xff] %v675
    %698 = vst [vmem:[#allocation11 + $0x20] sm:$0xff] %v680
    %699 = vst [vmem:[#allocation11 + $0x28] sm:$0xff] %v683
    %700 = vst [vmem:[#allocation11 + $0x30] sm:$0xff] %v688
    %701 = vst [vmem:[#allocation11 + $0x38] sm:$0xff] %v691
    // Predicated region
    $region58: #{tpu_custom_call.1} parent=1 // pred_check
      _
    $region59: #{tpu_custom_call.1} parent=1 // pred_check_branch
      %703 = sbr.rel (0) target = $region61
    $region60: #{tpu_custom_call.1} parent=1 // pred_region
      %s705 = ssub.s32 1024, 1024
      %706 = vsyncadd [#allocation4], %s705
      %s707 = sshll.u32 [#allocation11], 4
      %s708 = int_to_ptr.vmem [resolvable:$true] %s707
      %713 = dma.vmem_to_hbm [thread:$0]  %s708, 1024, %s9, [#allocation4], 128, 128, 8
    $region61: #{tpu_custom_call.1} parent=1 // pred_fallthru
      _
    // Predicated region
    $region62: #{tpu_custom_call.1} parent=1 // pred_check
      _
    $region63: #{tpu_custom_call.1} parent=1 // pred_check_branch
      %715 = sbr.rel (0) target = $region65
    $region64: #{tpu_custom_call.1} parent=1 // pred_region
      %716 = dma.done [#allocation4], 1024
    $region65: #{tpu_custom_call.1} parent=1 // pred_fallthru
      _
    %717 = vsyncpa [#allocation3], 1
    %718 = vsyncpa [#allocation6], 1
    %719 = vsyncpa [#allocation9], 1
    %720 = vsyncpa [#allocation4], 1

</llo_original>
